<compile_context>
chip_gen: v5e
topology: v5e:2x2
jax: 0.10.0
libtpu: 0.0.40
codegen_flags: <defaults>
</compile_context>

<pallas_src>
import functools
import math

import numpy as np

import jax
import jax.numpy as jnp
from jax.experimental import pallas as pl
from jax.experimental.pallas import tpu as pltpu


def _sinusoidal_kernel(t_ref, freqs_ref, out_ref, *, half_dim, pad):
    # t_ref:     (TB, 1)        int32 (or float) timesteps
    # freqs_ref: (1, half_dim)  f32 precomputed frequencies
    # out_ref:   (TB, D)        f32, D = 2*half_dim (+1 if pad)
    t = t_ref[...].astype(jnp.float32)             # (TB, 1)  cast fuses with the mul
    arg = t * freqs_ref[...]                       # (TB, H)  VPU broadcast multiply
    out_ref[:, :half_dim] = jnp.sin(arg)           # direct slice stores, no concat
    out_ref[:, half_dim:2 * half_dim] = jnp.cos(arg)
    if pad:
        # matches torch F.pad(emb, (0, 1, 0, 0)) — one 1-lane masked store
        out_ref[:, 2 * half_dim:] = jnp.zeros((out_ref.shape[0], 1), out_ref.dtype)


def sinusoidal_position_embeddings(timesteps, embedding_dim, *, block_rows=512):
    """Pallas equivalent of SinusoidalPositionEmbeddings.forward."""
    assert timesteps.ndim == 1
    half_dim = embedding_dim // 2
    # PyTorch divides by (half_dim - 1); guard the degenerate dims the original also breaks on.
    assert half_dim >= 2, "embedding_dim must be >= 4"

    b = timesteps.shape[0]
    pad = (embedding_dim % 2 == 1)

    # Compile-time constant frequencies (identical f32 math to the PyTorch module).
    neg_log_scale = np.float32(-(math.log(10000.0) / (half_dim - 1)))
    freqs = np.exp(np.arange(half_dim, dtype=np.float32) * neg_log_scale)
    freqs = jnp.asarray(freqs.astype(np.float32).reshape(1, half_dim))

    # Keep original integer dtype; cast happens in-kernel.  (b,) -> (b, 1) is free.
    t2d = timesteps.reshape(b, 1)

    # Batch tiling: one block at small B; 512-row (sublane-aligned) pipelined blocks
    # otherwise.  Per-block output VMEM stays small (512 * D * 4B).
    tb = b if b <= block_rows else block_rows
    grid = (pl.cdiv(b, tb),)

    kernel = functools.partial(_sinusoidal_kernel, half_dim=half_dim, pad=pad)

    return pl.pallas_call(
        kernel,
        out_shape=jax.ShapeDtypeStruct((b, embedding_dim), jnp.float32),
        grid=grid,
        in_specs=[
            pl.BlockSpec((tb, 1), lambda i: (i, 0)),         # timesteps tile
            pl.BlockSpec((1, half_dim), lambda i: (0, 0)),   # freqs: same block every step
        ],
        out_specs=pl.BlockSpec((tb, embedding_dim), lambda i: (i, 0)),
        compiler_params=pltpu.CompilerParams(
            dimension_semantics=("parallel",),               # shard batch across TCs (v7x)
        ),
    )(t2d, freqs)


def _reference(timesteps_np, embedding_dim):
    # Same f32 freqs path as the module/kernel; sin/cos via numpy libm.
    half_dim = embedding_dim // 2
    neg_log_scale = np.float32(-(math.log(10000.0) / (half_dim - 1)))
    freqs = np.exp(np.arange(half_dim, dtype=np.float32) * neg_log_scale).astype(np.float32)
    arg = timesteps_np.astype(np.float32)[:, None] * freqs[None, :]
    emb = np.concatenate([np.sin(arg), np.cos(arg)], axis=1).astype(np.float32)
    if embedding_dim % 2 == 1:
        emb = np.pad(emb, ((0, 0), (0, 1)))
    return emb


if __name__ == "__main__":
    key = jax.random.PRNGKey(0)
    batch = 8

    # Integer diffusion timesteps, like the PyTorch module receives.
    timesteps = jax.random.randint(key, (batch,), 0, 1000, dtype=jnp.int32)
    t_np = np.asarray(timesteps)

    # Even dim (typical time-embedding width; lane-dense 128-wide output rows).
    dim_even = 128
    out = jax.block_until_ready(sinusoidal_position_embeddings(timesteps, dim_even))
    assert out.shape == (batch, dim_even)
    assert out.dtype == jnp.float32
    # atol=1e-4: args reach ~1000 rad, so f32 sin/cos range-reduction slop on either side
    # can be a few e-5; the phases themselves are bit-identical (same f32 freqs, one mul).
    np.testing.assert_allclose(np.asarray(out), _reference(t_np, dim_even),
                               atol=1e-4, rtol=1e-4)

    # Odd dim exercises the in-kernel zero pad (matches F.pad(emb, (0, 1, 0, 0))).
    dim_odd = 33
    out_odd = jax.block_until_ready(sinusoidal_position_embeddings(timesteps, dim_odd))
    assert out_odd.shape == (batch, dim_odd)
    np.testing.assert_allclose(np.asarray(out_odd), _reference(t_np, dim_odd),
                               atol=1e-4, rtol=1e-4)

    print("KERNEL_OK")
</pallas_src>

<mosaic_0001>
module attributes {stable_mosaic.version = 11 : i64} {
  func.func @_sinusoidal_kernel(%arg0: i32, %arg1: memref<8x1xi32, #tpu.memory_space<vmem>>, %arg2: memref<1x64xf32, #tpu.memory_space<vmem>>, %arg3: memref<8x128xf32, #tpu.memory_space<vmem>>) attributes {dimension_semantics = [#tpu.dimension_semantics<parallel>], iteration_bounds = array<i64: 1>, scalar_prefetch = 0 : i64, scratch_operands = 0 : i64, tpu.core_type = #tpu.core_type<tc>, window_params = [{transform_indices = @transform_0, window_bounds = array<i64: 8, 1>}, {pipeline_mode = #tpu.pipeline_mode<synchronous>, transform_indices = @transform_1, window_bounds = array<i64: 1, 64>}, {transform_indices = @transform_2, window_bounds = array<i64: 8, 128>}]} {
    %c0 = arith.constant 0 : index
    %c0_0 = arith.constant 0 : index
    %0 = vector.load %arg1[%c0, %c0_0] : memref<8x1xi32, #tpu.memory_space<vmem>>, vector<8x1xi32>
    %1 = arith.sitofp %0 : vector<8x1xi32> to vector<8x1xf32>
    %c0_1 = arith.constant 0 : index
    %c0_2 = arith.constant 0 : index
    %2 = vector.load %arg2[%c0_1, %c0_2] : memref<1x64xf32, #tpu.memory_space<vmem>>, vector<1x64xf32>
    %3 = vector.broadcast %1 : vector<8x1xf32> to vector<8x64xf32>
    %4 = vector.broadcast %2 : vector<1x64xf32> to vector<8x64xf32>
    %5 = arith.mulf %3, %4 : vector<8x64xf32>
    %6 = math.sin %5 : vector<8x64xf32>
    %c0_3 = arith.constant 0 : index
    %c0_4 = arith.constant 0 : index
    %7 = vector.load %arg3[%c0_3, %c0_4] : memref<8x128xf32, #tpu.memory_space<vmem>>, vector<8x64xf32>
    tpu.vector_store %arg3[%c0_3, %c0_4], %6 {strides = array<i32>} : memref<8x128xf32, #tpu.memory_space<vmem>>, vector<8x64xf32>,
    %8 = math.cos %5 : vector<8x64xf32>
    %c0_5 = arith.constant 0 : index
    %c64 = arith.constant 64 : index
    %9 = vector.load %arg3[%c0_5, %c64] : memref<8x128xf32, #tpu.memory_space<vmem>>, vector<8x64xf32>
    tpu.vector_store %arg3[%c0_5, %c64], %8 {strides = array<i32>} : memref<8x128xf32, #tpu.memory_space<vmem>>, vector<8x64xf32>,
    return
  }
  func.func @transform_0(%arg0: i32) -> (i32, i32) {
    %c0_i32 = arith.constant 0 : i32
    %c0_i32_0 = arith.constant 0 : i32
    return %arg0, %c0_i32 : i32, i32
  }
  func.func @transform_1(%arg0: i32) -> (i32, i32) {
    %c0_i32 = arith.constant 0 : i32
    %c0_i32_0 = arith.constant 0 : i32
    %c0_i32_1 = arith.constant 0 : i32
    return %c0_i32, %c0_i32_0 : i32, i32
  }
  func.func @transform_2(%arg0: i32) -> (i32, i32) {
    %c0_i32 = arith.constant 0 : i32
    %c0_i32_0 = arith.constant 0 : i32
    return %arg0, %c0_i32 : i32, i32
  }
}

</mosaic_0001>

<llo_original>
// kernel: tpu_custom_call.1
$region0: #{tpu_custom_call.1}
  #allocation0 [shape = 'u32[]', space=smem, size = 0x4, offset = 0x4, fixed_abs, tag = 'smem constant byte address 0x4 - core index']
  #allocation1 [shape = 'u32[72,128]{1,0:T(1,128)}', space=vmem, size = 0x9000, scoped, tag = 'internal scratch']
  %s0 = inlined_call_operand.vmem [shape: s32[8,1], index: 0, kind: input, shape index: {}]
  %s1 = inlined_call_operand.vmem [shape: f32[1,64], index: 1, kind: input, shape index: {}]
  %s2 = inlined_call_operand.hbm [shape: f32[8,128], index: 2, kind: output, shape index: {}]
  %s3 = sld [smem:[#allocation0]]
  $region18: #{tpu_custom_call.1} parent=0
    _
  %s5 = ssub.s32 1, %s3
  %s6 = scalar_select 0, %s5, %s3
  $region1: #{tpu_custom_call.1} parent=0
    #allocation2 [shape = 'u8[4096]{0}', space=vmem, size = 0x1000, scoped, tag = 'output window, operand 0, single buffered']
    #allocation3 [shape = 's32[1]{0}', space=sflag, size = 0x4, scoped, tag = 'scoped memory for tpu_custom_call.1']
    %7 = vsyncpa [#allocation3], 0
    // Predicated region
    $region2: #{tpu_custom_call.1} parent=1 // pred_check
      _
    $region3: #{tpu_custom_call.1} parent=1 // pred_check_branch
      %9 = sbr.rel (0) target = $region5
    $region4: #{tpu_custom_call.1} parent=1 // pred_region
      _
    $region5: #{tpu_custom_call.1} parent=1 // pred_fallthru
      _
    // Predicated region
    $region6: #{tpu_custom_call.1} parent=1 // pred_check
      _
    $region7: #{tpu_custom_call.1} parent=1 // pred_check_branch
      %11 = sbr.rel (0) target = $region9
    $region8: #{tpu_custom_call.1} parent=1 // pred_region
      _
    $region9: #{tpu_custom_call.1} parent=1 // pred_fallthru
      _
    %v12 = vld [vmem:[%s0] sm:$0xff]
    %v13 = vcvt.s32.f32 %v12
    %v14 = vld [vmem:[%s1] sm:$0x1]
    %16 = vset.pattern.permute.xlu0 0
    %17 = vperm.xlu0 %16, %v13
    %v18 = vpop.permute.xlu0 %17
    %v21 = vperm.slane %v14, 0
    %v23 = vmul.f32 %v18, %v21
    %v24 = vand.u32 2147483647, %v23
    %vm25 = vcmp.le.f32.partialorder %v24, 0.7853982
    %vm26 = vcmp.lt.s32.totalorder %v23, 0
    %v27 = vand.u32 %v23, 2139095040
    %v28 = vshrl.u32 %v27, 23
    %v29 = vsub.s32 %v28, 127
    %v30 = vand.u32 2147483647, %v23
    %v31 = vand.u32 %v30, 8388607
    %v32 = vor.u32 %v31, 8388608
    %v33 = vsub.s32 0, %v32
    %v34 = vadd.s32 %v29, 1
    %vm35 = vcmp.gt.s32.totalorder %v34, 0
    %v36 = vsel %vm35, %v34, 0
    %v37 = vshrl.u32 %v36, 5
    %v38 = vand.u32 %v36, 31
    %v39 = vsub.s32 32, %v38
    %v40 = vshrl.u32 683565275, %v39
    %v41 = vshll.u32 683565275, %v38
    %v42 = vshrl.u32 2475754826, %v39
    %v43 = vor.u32 %v41, %v42
    %v44 = vshll.u32 2475754826, %v38
    %v45 = vshrl.u32 2131351028, %v39
    %v46 = vor.u32 %v44, %v45
    %v47 = vshll.u32 2131351028, %v38
    %v48 = vshrl.u32 2102212464, %v39
    %v49 = vor.u32 %v47, %v48
    %v50 = vshll.u32 2102212464, %v38
    %v51 = vshrl.u32 920167782, %v39
    %v52 = vor.u32 %v50, %v51
    %v53 = vshll.u32 920167782, %v38
    %v54 = vshrl.u32 1326507024, %v39
    %v55 = vor.u32 %v53, %v54
    %vm56 = vcmp.lt.s32.totalorder %v37, 1
    %vm57 = vcmp.lt.s32.totalorder %v37, 2
    %vm58 = vcmp.lt.s32.totalorder %v37, 3
    %vm59 = vcmp.lt.s32.totalorder %v37, 4
    %v60 = vsel %vm56, %v40, %v43
    %v61 = vsel %vm59, %v49, 2102212464
    %v62 = vsel %vm58, %v46, %v61
    %v63 = vsel %vm57, %v60, %v62
    %v64 = vsel %vm56, %v43, %v46
    %v65 = vsel %vm59, %v52, 920167782
    %v66 = vsel %vm58, %v49, %v65
    %v67 = vsel %vm57, %v64, %v66
    %v68 = vsel %vm56, %v46, %v49
    %v69 = vsel %vm59, %v55, 1326507024
    %v70 = vsel %vm58, %v52, %v69
    %v71 = vsel %vm57, %v68, %v70
    %v72 = vshll.u32 %v32, 8
    %v73 = vand.u32 %v72, 65535
    %v74 = vshrl.u32 %v72, 16
    %v75 = vand.u32 %v71, 65535
    %v76 = vshrl.u32 %v71, 16
    %v77 = vmul.u32 %v73, %v75
    %v78 = vmul.u32 %v73, %v76
    %v79 = vmul.u32 %v74, %v75
    %v80 = vmul.u32 %v74, %v76
    %v81 = vshll.u32 %v78, 16
    %v82 = vshrl.u32 %v78, 16
    %v83 = vshll.u32 %v79, 16
    %v84 = vshrl.u32 %v79, 16
    %vm85 = vc.u32 %v77, %v81
    %v86 = vsel %vm85, 1, 0
    %v87 = vadd.s32 %v77, %v81
    %v88 = vadd.s32 %v80, %v86
    %vm89 = vc.u32 %v87, %v83
    %v90 = vsel %vm89, 1, 0
    %v91 = vadd.s32 %v87, %v83
    %v92 = vadd.s32 %v88, %v90
    %v93 = vadd.s32 %v92, %v82
    %v94 = vadd.s32 %v93, %v84
    %v95 = vand.u32 %v72, 65535
    %v96 = vshrl.u32 %v72, 16
    %v97 = vand.u32 %v67, 65535
    %v98 = vshrl.u32 %v67, 16
    %v99 = vmul.u32 %v95, %v97
    %v100 = vmul.u32 %v95, %v98
    %v101 = vmul.u32 %v96, %v97
    %v102 = vmul.u32 %v96, %v98
    %v103 = vshll.u32 %v100, 16
    %v104 = vshrl.u32 %v100, 16
    %v105 = vshll.u32 %v101, 16
    %v106 = vshrl.u32 %v101, 16
    %vm107 = vc.u32 %v99, %v103
    %v108 = vsel %vm107, 1, 0
    %v109 = vadd.s32 %v99, %v103
    %v110 = vadd.s32 %v102, %v108
    %vm111 = vc.u32 %v109, %v105
    %v112 = vsel %vm111, 1, 0
    %v113 = vadd.s32 %v109, %v105
    %v114 = vadd.s32 %v110, %v112
    %v115 = vadd.s32 %v114, %v104
    %v116 = vadd.s32 %v115, %v106
    %v117 = vmul.u32 %v72, %v63
    %v118 = vadd.s32 %v94, %v113
    %vm119 = vc.u32 %v94, %v113
    %v120 = vadd.s32 %v116, 1
    %v121 = vsel %vm119, %v120, %v116
    %v122 = vadd.s32 %v117, %v121
    %v123 = vadd.s32 %v122, 536870912
    %v124 = vshrl.u32 %v123, 30
    %v125 = vshll.u32 %v124, 30
    %v126 = vsub.s32 %v122, %v125
    %vm127 = vcmp.lt.s32.totalorder %v126, 0
    %v128 = vsub.s32 0, %v126
    %v129 = vsel %vm127, %v128, %v126
    %v130 = vclz %v129
    %v131 = vsub.s32 %v130, 2
    %vm132 = vcmp.gt.s32.totalorder 0, %v131
    %v133 = vsel %vm132, 0, %v131
    %v134 = vsub.s32 32, %v133
    %v135 = vshll.u32 %v126, %v133
    %v136 = vshrl.u32 %v118, %v134
    %v137 = vor.u32 %v135, %v136
    %v138 = vsub.s32 4294967266, %v133
    %v139 = vadd.s32 %v138, 127
    %v140 = vshll.u32 %v139, 23
    %v141 = vor.u32 4788187, %v140
    %v142 = vand.u32 2147483647, %v141
    %v144 = vcvt.s32.f32 %v137
    %v145 = vmul.f32 %v144, %v142
    %v146 = vxor.u32 %v145, 2147483648
    %v147 = vsel %vm26, %v146, %v145
    %v148 = vsub.s32 4, %v124
    %v149 = vsel %vm26, %v148, %v124
    %v150 = vsel %vm25, %v23, %v147
    %v151 = vsel %vm25, 0, %v149
    %v152 = vmul.f32 %v150, %v150
    %v153 = vmul.f32 %v152, -0.001358992
    %v154 = vadd.f32 %v153, 0.041655596
    %v155 = vmul.f32 %v152, %v154
    %v156 = vadd.f32 %v155, -0.4999988
    %v157 = vmul.f32 %v152, %v156
    %v158 = vadd.f32 1.0, %v157
    %v159 = vmul.f32 %v150, %v150
    %v160 = vmul.f32 %v159, -0.00019511016
    %v161 = vadd.f32 %v160, 0.008332121
    %v162 = vmul.f32 %v159, %v161
    %v163 = vadd.f32 %v162, -0.16666654
    %v164 = vmul.f32 %v159, %v163
    %v165 = vadd.f32 %v164, 1.0
    %v166 = vmul.f32 %v165, %v150
    %vm167 = vweird.f32 %v23
    %v168 = vadd.s32 %v151, 3
    %v169 = vand.u32 %v168, 3
    %vm170 = vcmp.lt.s32.totalorder %v169, 2
    %vm171 = vcmp.eq.s32.totalorder %v169, 0
    %v172 = vxor.u32 %v166, 2147483648
    %v173 = vsel %vm171, %v158, %v172
    %vm174 = vcmp.eq.s32.totalorder %v169, 2
    %v175 = vxor.u32 %v158, 2147483648
    %v176 = vsel %vm174, %v175, %v166
    %v177 = vsel %vm170, %v173, %v176
    %v178 = vsel %vm167, nan, %v177
    %vm179 = vcmask 523264
    %180 = vst.msk [vmem:[#allocation2] sm:$0xff] %vm179, %v178
    %v181 = vand.u32 2147483647, %v23
    %vm182 = vcmp.le.f32.partialorder %v181, 0.7853982
    %vm183 = vcmp.lt.s32.totalorder %v23, 0
    %v184 = vand.u32 %v23, 2139095040
    %v185 = vshrl.u32 %v184, 23
    %v186 = vsub.s32 %v185, 127
    %v187 = vand.u32 2147483647, %v23
    %v188 = vand.u32 %v187, 8388607
    %v189 = vor.u32 %v188, 8388608
    %v190 = vsub.s32 0, %v189
    %v191 = vadd.s32 %v186, 1
    %vm192 = vcmp.gt.s32.totalorder %v191, 0
    %v193 = vsel %vm192, %v191, 0
    %v194 = vshrl.u32 %v193, 5
    %v195 = vand.u32 %v193, 31
    %v196 = vsub.s32 32, %v195
    %v197 = vshrl.u32 683565275, %v196
    %v198 = vshll.u32 683565275, %v195
    %v199 = vshrl.u32 2475754826, %v196
    %v200 = vor.u32 %v198, %v199
    %v201 = vshll.u32 2475754826, %v195
    %v202 = vshrl.u32 2131351028, %v196
    %v203 = vor.u32 %v201, %v202
    %v204 = vshll.u32 2131351028, %v195
    %v205 = vshrl.u32 2102212464, %v196
    %v206 = vor.u32 %v204, %v205
    %v207 = vshll.u32 2102212464, %v195
    %v208 = vshrl.u32 920167782, %v196
    %v209 = vor.u32 %v207, %v208
    %v210 = vshll.u32 920167782, %v195
    %v211 = vshrl.u32 1326507024, %v196
    %v212 = vor.u32 %v210, %v211
    %vm213 = vcmp.lt.s32.totalorder %v194, 1
    %vm214 = vcmp.lt.s32.totalorder %v194, 2
    %vm215 = vcmp.lt.s32.totalorder %v194, 3
    %vm216 = vcmp.lt.s32.totalorder %v194, 4
    %v217 = vsel %vm213, %v197, %v200
    %v218 = vsel %vm216, %v206, 2102212464
    %v219 = vsel %vm215, %v203, %v218
    %v220 = vsel %vm214, %v217, %v219
    %v221 = vsel %vm213, %v200, %v203
    %v222 = vsel %vm216, %v209, 920167782
    %v223 = vsel %vm215, %v206, %v222
    %v224 = vsel %vm214, %v221, %v223
    %v225 = vsel %vm213, %v203, %v206
    %v226 = vsel %vm216, %v212, 1326507024
    %v227 = vsel %vm215, %v209, %v226
    %v228 = vsel %vm214, %v225, %v227
    %v229 = vshll.u32 %v189, 8
    %v230 = vand.u32 %v229, 65535
    %v231 = vshrl.u32 %v229, 16
    %v232 = vand.u32 %v228, 65535
    %v233 = vshrl.u32 %v228, 16
    %v234 = vmul.u32 %v230, %v232
    %v235 = vmul.u32 %v230, %v233
    %v236 = vmul.u32 %v231, %v232
    %v237 = vmul.u32 %v231, %v233
    %v238 = vshll.u32 %v235, 16
    %v239 = vshrl.u32 %v235, 16
    %v240 = vshll.u32 %v236, 16
    %v241 = vshrl.u32 %v236, 16
    %vm242 = vc.u32 %v234, %v238
    %v243 = vsel %vm242, 1, 0
    %v244 = vadd.s32 %v234, %v238
    %v245 = vadd.s32 %v237, %v243
    %vm246 = vc.u32 %v244, %v240
    %v247 = vsel %vm246, 1, 0
    %v248 = vadd.s32 %v244, %v240
    %v249 = vadd.s32 %v245, %v247
    %v250 = vadd.s32 %v249, %v239
    %v251 = vadd.s32 %v250, %v241
    %v252 = vand.u32 %v229, 65535
    %v253 = vshrl.u32 %v229, 16
    %v254 = vand.u32 %v224, 65535
    %v255 = vshrl.u32 %v224, 16
    %v256 = vmul.u32 %v252, %v254
    %v257 = vmul.u32 %v252, %v255
    %v258 = vmul.u32 %v253, %v254
    %v259 = vmul.u32 %v253, %v255
    %v260 = vshll.u32 %v257, 16
    %v261 = vshrl.u32 %v257, 16
    %v262 = vshll.u32 %v258, 16
    %v263 = vshrl.u32 %v258, 16
    %vm264 = vc.u32 %v256, %v260
    %v265 = vsel %vm264, 1, 0
    %v266 = vadd.s32 %v256, %v260
    %v267 = vadd.s32 %v259, %v265
    %vm268 = vc.u32 %v266, %v262
    %v269 = vsel %vm268, 1, 0
    %v270 = vadd.s32 %v266, %v262
    %v271 = vadd.s32 %v267, %v269
    %v272 = vadd.s32 %v271, %v261
    %v273 = vadd.s32 %v272, %v263
    %v274 = vmul.u32 %v229, %v220
    %v275 = vadd.s32 %v251, %v270
    %vm276 = vc.u32 %v251, %v270
    %v277 = vadd.s32 %v273, 1
    %v278 = vsel %vm276, %v277, %v273
    %v279 = vadd.s32 %v274, %v278
    %v280 = vadd.s32 %v279, 536870912
    %v281 = vshrl.u32 %v280, 30
    %v282 = vshll.u32 %v281, 30
    %v283 = vsub.s32 %v279, %v282
    %vm284 = vcmp.lt.s32.totalorder %v283, 0
    %v285 = vsub.s32 0, %v283
    %v286 = vsel %vm284, %v285, %v283
    %v287 = vclz %v286
    %v288 = vsub.s32 %v287, 2
    %vm289 = vcmp.gt.s32.totalorder 0, %v288
    %v290 = vsel %vm289, 0, %v288
    %v291 = vsub.s32 32, %v290
    %v292 = vshll.u32 %v283, %v290
    %v293 = vshrl.u32 %v275, %v291
    %v294 = vor.u32 %v292, %v293
    %v295 = vsub.s32 4294967266, %v290
    %v296 = vadd.s32 %v295, 127
    %v297 = vshll.u32 %v296, 23
    %v298 = vor.u32 4788187, %v297
    %v299 = vand.u32 2147483647, %v298
    %v301 = vcvt.s32.f32 %v294
    %v302 = vmul.f32 %v301, %v299
    %v303 = vxor.u32 %v302, 2147483648
    %v304 = vsel %vm183, %v303, %v302
    %v305 = vsub.s32 4, %v281
    %v306 = vsel %vm183, %v305, %v281
    %v307 = vsel %vm182, %v23, %v304
    %v308 = vsel %vm182, 0, %v306
    %v309 = vmul.f32 %v307, %v307
    %v310 = vmul.f32 %v309, -0.001358992
    %v311 = vadd.f32 %v310, 0.041655596
    %v312 = vmul.f32 %v309, %v311
    %v313 = vadd.f32 %v312, -0.4999988
    %v314 = vmul.f32 %v309, %v313
    %v315 = vadd.f32 1.0, %v314
    %v316 = vmul.f32 %v307, %v307
    %v317 = vmul.f32 %v316, -0.00019511016
    %v318 = vadd.f32 %v317, 0.008332121
    %v319 = vmul.f32 %v316, %v318
    %v320 = vadd.f32 %v319, -0.16666654
    %v321 = vmul.f32 %v316, %v320
    %v322 = vadd.f32 %v321, 1.0
    %v323 = vmul.f32 %v322, %v307
    %vm324 = vweird.f32 %v23
    %v325 = vand.u32 %v308, 3
    %vm326 = vcmp.lt.s32.totalorder %v325, 2
    %vm327 = vcmp.eq.s32.totalorder %v325, 0
    %v328 = vxor.u32 %v323, 2147483648
    %v329 = vsel %vm327, %v315, %v328
    %vm330 = vcmp.eq.s32.totalorder %v325, 2
    %v331 = vxor.u32 %v315, 2147483648
    %v332 = vsel %vm330, %v331, %v323
    %v333 = vsel %vm326, %v329, %v332
    %v334 = vsel %vm324, nan, %v333
    %336 = vrot.lane.b32.xlu0 %v334, 64
    %v337 = vpop.permute.xlu0 %336
    %vm339 = vcmask 1048064
    %340 = vst.msk [vmem:[#allocation2] sm:$0xff] %vm339, %v337
    // Predicated region
    $region10: #{tpu_custom_call.1} parent=1 // pred_check
      _
    $region11: #{tpu_custom_call.1} parent=1 // pred_check_branch
      %342 = sbr.rel (0) target = $region13
    $region12: #{tpu_custom_call.1} parent=1 // pred_region
      %344 = vsyncadd [#allocation3], 0
      %s346 = sshll.u32 [#allocation2], 4
      %s347 = int_to_ptr.vmem [resolvable:$true] %s346
      %s348 = sshll.u32 %s2, 4
      %s349 = int_to_ptr.hbm [resolvable:$true] %s348
      %351 = dma.vmem_to_hbm [thread:$0]  %s347, 128, %s349, [#allocation3]
    $region13: #{tpu_custom_call.1} parent=1 // pred_fallthru
      _
    // Predicated region
    $region14: #{tpu_custom_call.1} parent=1 // pred_check
      _
    $region15: #{tpu_custom_call.1} parent=1 // pred_check_branch
      %353 = sbr.rel (0) target = $region17
    $region16: #{tpu_custom_call.1} parent=1 // pred_region
      %355 = dma.done [#allocation3], 128
    $region17: #{tpu_custom_call.1} parent=1 // pred_fallthru
      _
    %356 = vsyncpa [#allocation3], 1

</llo_original>
